<compile_context>
chip_gen: v6e
topology: v6e:2x2x1
jax: 0.10.0
libtpu: 0.0.40
codegen_flags: <defaults>
</compile_context>

<pallas_src>
import functools

import jax
import jax.numpy as jnp
from jax.experimental import pallas as pl
from jax.experimental.pallas import tpu as pltpu


# ----------------------------------------------------------------------------
# Pallas kernels
# ----------------------------------------------------------------------------
def _transform_kernel(h_ref, w_ref, o_ref):
    """HW = H @ W for one row tile of H (layer 0 only).  W stays resident."""
    o_ref[...] = jnp.dot(h_ref[...], w_ref[...],
                         preferred_element_type=jnp.float32).astype(o_ref.dtype)


def _agg_fused_kernel(a_ref, hw_ref, b_ref, g_ref, beta_ref, wn_ref, o_ref,
                      acc_ref, *, tk, f_true, eps, use_act, hw_resident):
    """acc += A_tile @ HW; epilogue = bias + ReLU + LayerNorm + next-layer H@W."""
    k = pl.program_id(1)

    @pl.when(k == 0)
    def _():
        acc_ref[...] = jnp.zeros_like(acc_ref)

    if hw_resident:
        start = pl.multiple_of(k * tk, tk)
        hw_blk = hw_ref[pl.ds(start, tk), :]
    else:
        hw_blk = hw_ref[...]
    acc_ref[...] += jnp.dot(a_ref[...], hw_blk,
                            preferred_element_type=jnp.float32)

    @pl.when(k == pl.num_programs(1) - 1)
    def _():
        z = acc_ref[...] + b_ref[...]
        if use_act:
            z = jnp.maximum(z, 0.0)
        # LayerNorm over the true feature columns.  Padded lanes of z are
        # exactly zero (zero-padded W/bias, ReLU preserves zero), so the mean
        # needs no mask; only the centered value is masked for the variance.
        inv_f = jnp.float32(1.0 / f_true)
        mu = jnp.sum(z, axis=-1, keepdims=True) * inv_f
        d = z - mu
        if f_true != z.shape[-1]:
            lane = jax.lax.broadcasted_iota(jnp.int32, z.shape, 1)
            d = jnp.where(lane < f_true, d, 0.0)
        var = jnp.sum(d * d, axis=-1, keepdims=True) * inv_f
        zn = d * jax.lax.rsqrt(var + eps) * g_ref[...] + beta_ref[...]
        # Fused next-layer feature transform: HW_{l+1} = LN(z) @ W_{l+1}.
        o_ref[...] = jnp.dot(zn.astype(jnp.bfloat16), wn_ref[...],
                             preferred_element_type=jnp.float32
                             ).astype(o_ref.dtype)


def _agg_final_kernel(a_ref, hw_ref, b_ref, o_ref, *, tk, use_act,
                      hw_resident):
    """Final layer: accumulate directly into the resident f32 output block."""
    k = pl.program_id(1)

    @pl.when(k == 0)
    def _():
        o_ref[...] = jnp.zeros_like(o_ref)

    if hw_resident:
        start = pl.multiple_of(k * tk, tk)
        hw_blk = hw_ref[pl.ds(start, tk), :]
    else:
        hw_blk = hw_ref[...]
    o_ref[...] += jnp.dot(a_ref[...], hw_blk,
                          preferred_element_type=jnp.float32)

    @pl.when(k == pl.num_programs(1) - 1)
    def _():
        z = o_ref[...] + b_ref[...]
        if use_act:
            z = jnp.maximum(z, 0.0)
        o_ref[...] = z


# ----------------------------------------------------------------------------
# VMEM budget / tile selection
# ----------------------------------------------------------------------------
def _round_up(x, m):
    return ((x + m - 1) // m) * m


def _pad2(x, rows, cols):
    return jnp.pad(x, ((0, rows - x.shape[0]), (0, cols - x.shape[1])))


def _vmem_limit_bytes():
    """Per-generation VMEM budget: ~3/4 of physical, capped at 96 MiB.

    v5e/v6e (128 MiB) -> 96 MiB; v7x (64 MiB) / unknown -> 48 MiB.
    """
    cap = 64 * 1024 * 1024
    try:
        info = pltpu.get_tpu_info()
        cap = int(getattr(info, "vmem_capacity_bytes", cap) or cap)
    except Exception:
        pass
    return min(cap * 3 // 4, 96 * 1024 * 1024)


def _agg_footprint_bytes(tm, tk, n_pad, f_pad, fnext_pad, hw_resident):
    b = 2 * tm * tk * 2                                 # A_hat blocks (2x, bf16)
    b += (2 * n_pad * f_pad * 2) if hw_resident else (2 * tk * f_pad * 2)
    b += tm * f_pad * 4                                 # f32 accumulator
    b += 2 * tm * max(f_pad, fnext_pad) * 4             # output blocks (2x, worst f32)
    b += 2 * f_pad * fnext_pad * 2                      # resident W_{l+1} (2x)
    b += 6 * f_pad * 4                                  # bias / gamma / beta
    return b


def _choose_tiles(n, f_pad, fnext_pad, budget):
    """Pick the largest (tm, tk) that fits the budget; pad n up to the tile."""
    n_pad0 = _round_up(max(n, 128), 128)
    tk = 128
    for cand in (256, 512, 1024, 2048):
        if n_pad0 >= cand:
            tk = cand
    tm = min(512, tk)
    hw_resident = True
    n_pad = _round_up(n_pad0, tk)

    while _agg_footprint_bytes(tm, tk, n_pad, f_pad, fnext_pad,
                               hw_resident) > budget:
        if hw_resident and 2 * n_pad * f_pad * 2 > budget // 4:
            hw_resident = False            # fall back to streaming HW K-blocks
        elif tk > 128:
            tk //= 2
            tm = min(tm, tk)
            n_pad = _round_up(n_pad0, tk)
        elif tm > 128:
            tm //= 2
        else:
            break

    # v7x megacore: keep the row-tile count even so both TensorCores split the
    # "parallel" row axis evenly (harmless on single-TC v5e/v6e).
    if (n_pad // tm) > 1 and (n_pad // tm) % 2 == 1 and tm >= 256:
        tm //= 2
    return tm, tk, n_pad, hw_resident


# ----------------------------------------------------------------------------
# pallas_call wrappers
# ----------------------------------------------------------------------------
def feature_transform(h_bf16, w_bf16, *, tm, vmem_limit):
    """(N_pad, Fin_pad) bf16 @ (Fin_pad, Fout_pad) bf16 -> (N_pad, Fout_pad) bf16."""
    n_pad, fin_pad = h_bf16.shape
    fout_pad = w_bf16.shape[1]
    return pl.pallas_call(
        _transform_kernel,
        out_shape=jax.ShapeDtypeStruct((n_pad, fout_pad), jnp.bfloat16),
        grid=(n_pad // tm,),
        in_specs=[
            pl.BlockSpec((tm, fin_pad), lambda i: (i, 0)),
            pl.BlockSpec((fin_pad, fout_pad), lambda i: (0, 0)),   # resident
        ],
        out_specs=pl.BlockSpec((tm, fout_pad), lambda i: (i, 0)),
        compiler_params=pltpu.CompilerParams(
            dimension_semantics=("parallel",),
            vmem_limit_bytes=vmem_limit),
    )(h_bf16, w_bf16)


def aggregate_fused(a_bf16, hw_bf16, b2, g2, beta2, w_next_bf16, *, tm, tk,
                    hw_resident, f_true, eps, use_act, vmem_limit):
    """HW_{l+1} = (bias/ReLU/LN(A_hat @ HW_l)) @ W_{l+1}, all in one kernel."""
    n_pad = a_bf16.shape[0]
    fout_pad = hw_bf16.shape[1]
    fnext_pad = w_next_bf16.shape[1]
    kernel = functools.partial(_agg_fused_kernel, tk=tk, f_true=f_true,
                               eps=eps, use_act=use_act,
                               hw_resident=hw_resident)
    if hw_resident:
        hw_spec = pl.BlockSpec((n_pad, fout_pad), lambda i, k: (0, 0))
    else:
        hw_spec = pl.BlockSpec((tk, fout_pad), lambda i, k: (k, 0))
    return pl.pallas_call(
        kernel,
        out_shape=jax.ShapeDtypeStruct((n_pad, fnext_pad), jnp.bfloat16),
        grid=(n_pad // tm, n_pad // tk),
        in_specs=[
            pl.BlockSpec((tm, tk), lambda i, k: (i, k)),            # A_hat stream
            hw_spec,                                                # HW_l
            pl.BlockSpec((1, fout_pad), lambda i, k: (0, 0)),       # bias
            pl.BlockSpec((1, fout_pad), lambda i, k: (0, 0)),       # gamma
            pl.BlockSpec((1, fout_pad), lambda i, k: (0, 0)),       # beta
            pl.BlockSpec((fout_pad, fnext_pad), lambda i, k: (0, 0)),  # W_{l+1}
        ],
        out_specs=pl.BlockSpec((tm, fnext_pad), lambda i, k: (i, 0)),
        scratch_shapes=[pltpu.VMEM((tm, fout_pad), jnp.float32)],
        compiler_params=pltpu.CompilerParams(
            dimension_semantics=("parallel", "arbitrary"),
            vmem_limit_bytes=vmem_limit),
    )(a_bf16, hw_bf16, b2, g2, beta2, w_next_bf16)


def aggregate_final(a_bf16, hw_bf16, b2, *, tm, tk, hw_resident, use_act,
                    vmem_limit):
    """Final layer: Z = A_hat @ HW + bias (+ ReLU), accumulated in the output."""
    n_pad = a_bf16.shape[0]
    fout_pad = hw_bf16.shape[1]
    kernel = functools.partial(_agg_final_kernel, tk=tk, use_act=use_act,
                               hw_resident=hw_resident)
    if hw_resident:
        hw_spec = pl.BlockSpec((n_pad, fout_pad), lambda i, k: (0, 0))
    else:
        hw_spec = pl.BlockSpec((tk, fout_pad), lambda i, k: (k, 0))
    return pl.pallas_call(
        kernel,
        out_shape=jax.ShapeDtypeStruct((n_pad, fout_pad), jnp.float32),
        grid=(n_pad // tm, n_pad // tk),
        in_specs=[
            pl.BlockSpec((tm, tk), lambda i, k: (i, k)),
            hw_spec,
            pl.BlockSpec((1, fout_pad), lambda i, k: (0, 0)),
        ],
        out_specs=pl.BlockSpec((tm, fout_pad), lambda i, k: (i, 0)),
        compiler_params=pltpu.CompilerParams(
            dimension_semantics=("parallel", "arbitrary"),
            vmem_limit_bytes=vmem_limit),
    )(a_bf16, hw_bf16, b2)


# ----------------------------------------------------------------------------
# Graph normalization + parameters + layer loop
# ----------------------------------------------------------------------------
def normalize_adjacency(adj):
    """DGL GraphConv norm='both':  A_hat = D_in^-1/2 A D_out^-1/2  (f32).

    adj[i, j] = 1 iff there is an edge j -> i (rows = destination nodes).
    Zero-degree rows/cols produce zeros (allow_zero_in_degree=True).
    """
    adj = adj.astype(jnp.float32)
    deg_in = jnp.sum(adj, axis=1)
    deg_out = jnp.sum(adj, axis=0)
    inv_sqrt_in = jnp.where(deg_in > 0, 1.0 / jnp.sqrt(deg_in), 0.0)
    inv_sqrt_out = jnp.where(deg_out > 0, 1.0 / jnp.sqrt(deg_out), 0.0)
    return inv_sqrt_in[:, None] * adj * inv_sqrt_out[None, :]


def _normalized_adjacency_bf16(adj, n_pad):
    # Cast to bf16 before the pad so the padded N_pad^2 copy is 2 B/elem.
    a_hat = normalize_adjacency(adj).astype(jnp.bfloat16)
    return _pad2(a_hat, n_pad, n_pad)


def init_gcn_params(key, in_dim, num_hidden, out_dim, num_layers):
    """Deterministic (xavier-like) init of GraphConv weights + shared LayerNorm."""
    dims = ([in_dim] + [num_hidden] * (num_layers - 1) + [out_dim]
            if num_layers > 1 else [in_dim, out_dim])
    params = []
    for l in range(num_layers):
        key, wk = jax.random.split(key)
        fin, fout = dims[l], dims[l + 1]
        scale = jnp.sqrt(6.0 / (fin + fout))
        w = jax.random.uniform(wk, (fin, fout), jnp.float32, -scale, scale)
        b = jnp.zeros((fout,), jnp.float32)
        params.append((w, b))
    ln_gamma = jnp.ones((num_hidden,), jnp.float32)
    ln_beta = jnp.zeros((num_hidden,), jnp.float32)
    return params, (ln_gamma, ln_beta)


def gcn_forward(adj, x, params, ln_params, *, encoding=True, eps=1e-5):
    """Mirrors GCN.forward: dropout(identity) -> GraphConv -> norm (except last)."""
    n = adj.shape[0]
    num_layers = len(params)
    ln_gamma, ln_beta = ln_params

    f_pads = [_round_up(w.shape[1], 128) for w, _ in params]
    fin0_pad = _round_up(x.shape[1], 128)
    f_pad_max = max(f_pads)

    vmem_limit = _vmem_limit_bytes()
    tm, tk, n_pad, hw_resident = _choose_tiles(
        n, f_pad_max, f_pad_max, int(vmem_limit * 0.8))

    # Normalized adjacency, bf16, zero-padded to the tile grid (one-time cost).
    a_pad = _normalized_adjacency_bf16(adj, n_pad)

    # Pad + pre-cast parameters once (weights bf16 for the MXU, bias/LN f32).
    w_bf, b_f32 = [], []
    for l, (w, b) in enumerate(params):
        fin_l, fout_l = w.shape
        fin_p = fin0_pad if l == 0 else f_pads[l - 1]
        fout_p = f_pads[l]
        w_bf.append(_pad2(w.astype(jnp.float32), fin_p,
                          fout_p).astype(jnp.bfloat16))
        b_f32.append(jnp.pad(b.astype(jnp.float32),
                             (0, fout_p - fout_l)).reshape(1, fout_p))

    if num_layers > 1:
        hid = ln_gamma.shape[0]
        hid_pad = _round_up(hid, 128)
        g_p = jnp.pad(ln_gamma.astype(jnp.float32),
                      (0, hid_pad - hid)).reshape(1, hid_pad)
        be_p = jnp.pad(ln_beta.astype(jnp.float32),
                       (0, hid_pad - hid)).reshape(1, hid_pad)

    # TODO(synk): dropout is identity (eval mode); training dropout omitted.
    h0 = _pad2(x.astype(jnp.bfloat16), n_pad, fin0_pad)
    hw = feature_transform(h0, w_bf[0], tm=tm, vmem_limit=vmem_limit)

    out = None
    for l in range(num_layers):
        is_last = (l == num_layers - 1)
        if not is_last:
            hw = aggregate_fused(
                a_pad, hw, b_f32[l], g_p, be_p, w_bf[l + 1],
                tm=tm, tk=tk, hw_resident=hw_resident,
                f_true=params[l][0].shape[1], eps=eps, use_act=True,
                vmem_limit=vmem_limit)
        else:
            last_act = encoding or (num_layers == 1)
            out = aggregate_final(
                a_pad, hw, b_f32[l], tm=tm, tk=tk, hw_resident=hw_resident,
                use_act=last_act, vmem_limit=vmem_limit)

    out_dim = params[-1][0].shape[1]
    return out[:n, :out_dim]


# ----------------------------------------------------------------------------
# Pure-JAX reference (f32) for correctness checking
# ----------------------------------------------------------------------------
def gcn_reference(adj, x, params, ln_params, *, encoding=True, eps=1e-5):
    a_hat = normalize_adjacency(adj)
    ln_g, ln_b = ln_params
    num_layers = len(params)
    h = x.astype(jnp.float32)
    for l, (w, b) in enumerate(params):
        is_last = (l == num_layers - 1)
        z = a_hat @ (h @ w) + b[None, :]
        if (not is_last) or encoding or (num_layers == 1):
            z = jnp.maximum(z, 0.0)
        if not is_last:
            mu = jnp.mean(z, axis=-1, keepdims=True)
            var = jnp.mean((z - mu) ** 2, axis=-1, keepdims=True)
            z = (z - mu) * jax.lax.rsqrt(var + eps) * ln_g[None, :] + ln_b[None, :]
        h = z
    return h


# ----------------------------------------------------------------------------
# Main
# ----------------------------------------------------------------------------
def _run_case(key, n, in_dim, num_hidden, out_dim, num_layers, density):
    key, k_adj, k_feat, k_par = jax.random.split(key, 4)
    adj = (jax.random.uniform(k_adj, (n, n)) < density).astype(jnp.float32)
    x = jax.random.normal(k_feat, (n, in_dim), jnp.float32)
    params, ln_params = init_gcn_params(k_par, in_dim, num_hidden, out_dim,
                                        num_layers)

    out = gcn_forward(adj, x, params, ln_params, encoding=True)
    out = jax.block_until_ready(out)
    assert out.shape == (n, out_dim), out.shape
    assert bool(jnp.all(jnp.isfinite(out)))

    ref = gcn_reference(adj, x, params, ln_params, encoding=True)
    err = float(jnp.max(jnp.abs(out - ref)))
    # bf16 MXU streams with f32 accumulation -> small drift vs f32 reference
    assert err < 0.1, f"max abs err {err}"
    return key


if __name__ == "__main__":
    key = jax.random.PRNGKey(0)

    # small toy graph (matches the original example sizes)
    key = _run_case(key, n=64, in_dim=16, num_hidden=32, out_dim=8,
                    num_layers=2, density=0.15)

    # larger graph: exercises the (row-tile, K-tile) grid, resident HW and the
    # fused next-layer-transform epilogue across 3 layers
    key = _run_case(key, n=640, in_dim=48, num_hidden=96, out_dim=24,
                    num_layers=3, density=0.05)

    print("KERNEL_OK")
</pallas_src>

<mosaic_0001>
module attributes {stable_mosaic.version = 11 : i64} {
  func.func @_transform_kernel(%arg0: i32, %arg1: memref<128x128xbf16, #tpu.memory_space<vmem>>, %arg2: memref<128x128xbf16, #tpu.memory_space<vmem>>, %arg3: memref<128x128xbf16, #tpu.memory_space<vmem>>) attributes {dimension_semantics = [#tpu.dimension_semantics<parallel>], iteration_bounds = array<i64: 1>, scalar_prefetch = 0 : i64, scratch_operands = 0 : i64, tpu.core_type = #tpu.core_type<tc>, window_params = [{transform_indices = @transform_0, window_bounds = array<i64: 128, 128>}, {pipeline_mode = #tpu.pipeline_mode<synchronous>, transform_indices = @transform_1, window_bounds = array<i64: 128, 128>}, {transform_indices = @transform_2, window_bounds = array<i64: 128, 128>}]} {
    %c0 = arith.constant 0 : index
    %c0_0 = arith.constant 0 : index
    %0 = vector.load %arg1[%c0, %c0_0] : memref<128x128xbf16, #tpu.memory_space<vmem>>, vector<128x128xbf16>
    %c0_1 = arith.constant 0 : index
    %c0_2 = arith.constant 0 : index
    %1 = vector.load %arg2[%c0_1, %c0_2] : memref<128x128xbf16, #tpu.memory_space<vmem>>, vector<128x128xbf16>
    %cst = arith.constant dense<0.000000e+00> : vector<128x128xf32>
    %2 = tpu.matmul %0, %1, %cst {dimension_numbers = #tpu.dot_dimension_numbers<[1], [0], [0], [1], [0, 0, 1, 1], [], []>} : vector<128x128xbf16>, vector<128x128xbf16>, vector<128x128xf32> -> vector<128x128xf32>
    %3 = arith.truncf %2 : vector<128x128xf32> to vector<128x128xbf16>
    %c0_3 = arith.constant 0 : index
    %c0_4 = arith.constant 0 : index
    %4 = vector.load %arg3[%c0_3, %c0_4] : memref<128x128xbf16, #tpu.memory_space<vmem>>, vector<128x128xbf16>
    tpu.vector_store %arg3[%c0_3, %c0_4], %3 {strides = array<i32>} : memref<128x128xbf16, #tpu.memory_space<vmem>>, vector<128x128xbf16>,
    return
  }
  func.func @transform_0(%arg0: i32) -> (i32, i32) {
    %c0_i32 = arith.constant 0 : i32
    %c0_i32_0 = arith.constant 0 : i32
    return %arg0, %c0_i32 : i32, i32
  }
  func.func @transform_1(%arg0: i32) -> (i32, i32) {
    %c0_i32 = arith.constant 0 : i32
    %c0_i32_0 = arith.constant 0 : i32
    %c0_i32_1 = arith.constant 0 : i32
    return %c0_i32, %c0_i32_0 : i32, i32
  }
  func.func @transform_2(%arg0: i32) -> (i32, i32) {
    %c0_i32 = arith.constant 0 : i32
    %c0_i32_0 = arith.constant 0 : i32
    return %arg0, %c0_i32 : i32, i32
  }
}

</mosaic_0001>

<llo_original>
// kernel: tpu_custom_call.1
$region0: #{tpu_custom_call.1}
  #allocation0 [shape = 'u32[]', space=smem, size = 0x4, offset = 0x4, fixed_abs, tag = 'smem constant byte address 0x4 - core index']
  #allocation1 [shape = 'u32[144,128]{1,0:T(1,128)}', space=vmem, size = 0x12000, scoped, tag = 'internal scratch']
  %s0 = inlined_call_operand.hbm [shape: bf16[128,128], index: 0, kind: input, shape index: {}]
  %s1 = inlined_call_operand.hbm [shape: bf16[128,128], index: 1, kind: input, shape index: {}]
  %s2 = inlined_call_operand.hbm [shape: bf16[128,128], index: 2, kind: output, shape index: {}]
  %s3 = sld [smem:[#allocation0]]
  $region26: #{tpu_custom_call.1} parent=0
    _
  %s5 = ssub.s32 1, %s3
  %s6 = scalar_select 0, %s5, %s3
  $region1: #{tpu_custom_call.1} parent=0
    #allocation2 [shape = 'u8[32768]{0}', space=vmem, size = 0x8000, scoped, tag = 'input window, operand 0, single buffered']
    #allocation3 [shape = 's32[1]{0}', space=sflag, size = 0x4, scoped, tag = 'scoped memory for tpu_custom_call.1']
    #allocation4 [shape = 's32[1]{0}', space=sflag, size = 0x4, scoped, tag = 'scoped memory for tpu_custom_call.1']
    #allocation5 [shape = 'u8[32768]{0}', space=vmem, size = 0x8000, scoped, tag = 'input window, operand 1, single buffered']
    #allocation6 [shape = 's32[1]{0}', space=sflag, size = 0x4, scoped, tag = 'scoped memory for tpu_custom_call.1']
    #allocation7 [shape = 'u8[32768]{0}', space=vmem, size = 0x8000, scoped, tag = 'output window, operand 0, single buffered']
    %7 = vsyncpa [#allocation3], 0
    %8 = vsyncpa [#allocation6], 0
    %9 = vsyncpa [#allocation4], 0
    // Predicated region
    $region2: #{tpu_custom_call.1} parent=1 // pred_check
      _
    $region3: #{tpu_custom_call.1} parent=1 // pred_check_branch
      %11 = sbr.rel (0) target = $region5
    $region4: #{tpu_custom_call.1} parent=1 // pred_region
      %s13 = ssub.s32 1024, 1024
      %14 = vsyncadd [#allocation3], %s13
      %s15 = sshll.u32 [#allocation2], 4
      %s16 = int_to_ptr.vmem [resolvable:$true] %s15
      %21 = dma.hbm_to_vmem [thread:$0]  %s0, 1024, %s16, [#allocation3], 64, 64, 4
    $region5: #{tpu_custom_call.1} parent=1 // pred_fallthru
      _
    // Predicated region
    $region6: #{tpu_custom_call.1} parent=1 // pred_check
      _
    $region7: #{tpu_custom_call.1} parent=1 // pred_check_branch
      %23 = sbr.rel (0) target = $region9
    $region8: #{tpu_custom_call.1} parent=1 // pred_region
      %s25 = ssub.s32 1024, 1024
      %26 = vsyncadd [#allocation6], %s25
      %s27 = sshll.u32 [#allocation5], 4
      %s28 = int_to_ptr.vmem [resolvable:$true] %s27
      %33 = dma.hbm_to_vmem [thread:$0]  %s1, 1024, %s28, [#allocation6], 64, 64, 4
    $region9: #{tpu_custom_call.1} parent=1 // pred_fallthru
      _
    // Predicated region
    $region10: #{tpu_custom_call.1} parent=1 // pred_check
      _
    $region11: #{tpu_custom_call.1} parent=1 // pred_check_branch
      %35 = sbr.rel (0) target = $region13
    $region12: #{tpu_custom_call.1} parent=1 // pred_region
      %36 = dma.done [#allocation3], 1024
    $region13: #{tpu_custom_call.1} parent=1 // pred_fallthru
      _
    // Predicated region
    $region14: #{tpu_custom_call.1} parent=1 // pred_check
      _
    $region15: #{tpu_custom_call.1} parent=1 // pred_check_branch
      %38 = sbr.rel (0) target = $region17
    $region16: #{tpu_custom_call.1} parent=1 // pred_region
      %39 = dma.done [#allocation6], 1024
    $region17: #{tpu_custom_call.1} parent=1 // pred_fallthru
      _
    %v41 = vld [vmem:[#allocation2] sm:$0xf]
    %v42 = vld [vmem:[#allocation2 + $0x4] sm:$0xf]
    %v43 = vld [vmem:[#allocation2 + $0x8] sm:$0xf]
    %v44 = vld [vmem:[#allocation2 + $0xc] sm:$0xf]
    %v45 = vld [vmem:[#allocation2 + $0x10] sm:$0xf]
    %v46 = vld [vmem:[#allocation2 + $0x14] sm:$0xf]
    %v47 = vld [vmem:[#allocation2 + $0x18] sm:$0xf]
    %v48 = vld [vmem:[#allocation2 + $0x1c] sm:$0xf]
    %v49 = vld [vmem:[#allocation2 + $0x20] sm:$0xf]
    %v50 = vld [vmem:[#allocation2 + $0x24] sm:$0xf]
    %v51 = vld [vmem:[#allocation2 + $0x28] sm:$0xf]
    %v52 = vld [vmem:[#allocation2 + $0x2c] sm:$0xf]
    %v53 = vld [vmem:[#allocation2 + $0x30] sm:$0xf]
    %v54 = vld [vmem:[#allocation2 + $0x34] sm:$0xf]
    %v55 = vld [vmem:[#allocation2 + $0x38] sm:$0xf]
    %v56 = vld [vmem:[#allocation2 + $0x3c] sm:$0xf]
    %v57 = vld [vmem:[#allocation5] sm:$0xf]
    %v58 = vld [vmem:[#allocation5 + $0x4] sm:$0xf]
    %v59 = vld [vmem:[#allocation5 + $0x8] sm:$0xf]
    %v60 = vld [vmem:[#allocation5 + $0xc] sm:$0xf]
    %v61 = vld [vmem:[#allocation5 + $0x10] sm:$0xf]
    %v62 = vld [vmem:[#allocation5 + $0x14] sm:$0xf]
    %v63 = vld [vmem:[#allocation5 + $0x18] sm:$0xf]
    %v64 = vld [vmem:[#allocation5 + $0x1c] sm:$0xf]
    %v65 = vld [vmem:[#allocation5 + $0x20] sm:$0xf]
    %v66 = vld [vmem:[#allocation5 + $0x24] sm:$0xf]
    %v67 = vld [vmem:[#allocation5 + $0x28] sm:$0xf]
    %v68 = vld [vmem:[#allocation5 + $0x2c] sm:$0xf]
    %v69 = vld [vmem:[#allocation5 + $0x30] sm:$0xf]
    %v70 = vld [vmem:[#allocation5 + $0x34] sm:$0xf]
    %v71 = vld [vmem:[#allocation5 + $0x38] sm:$0xf]
    %v72 = vld [vmem:[#allocation5 + $0x3c] sm:$0xf]
    %v89 = vunpack.c.l.b16 %v41
    %v90 = vunpack.c.l.b16 %v42
    %v91 = vunpack.c.l.b16 %v43
    %v92 = vunpack.c.l.b16 %v44
    %v93 = vunpack.c.l.b16 %v45
    %v94 = vunpack.c.l.b16 %v46
    %v95 = vunpack.c.l.b16 %v47
    %v96 = vunpack.c.l.b16 %v48
    %v97 = vunpack.c.l.b16 %v49
    %v98 = vunpack.c.l.b16 %v50
    %v99 = vunpack.c.l.b16 %v51
    %v100 = vunpack.c.l.b16 %v52
    %v101 = vunpack.c.l.b16 %v53
    %v102 = vunpack.c.l.b16 %v54
    %v103 = vunpack.c.l.b16 %v55
    %v104 = vunpack.c.l.b16 %v56
    %v105 = vpack.c.b16 %v90, %v89
    %v106 = vpack.c.b16 %v92, %v91
    %v107 = vpack.c.b16 %v94, %v93
    %v108 = vpack.c.b16 %v96, %v95
    %v109 = vpack.c.b16 %v98, %v97
    %v110 = vpack.c.b16 %v100, %v99
    %v111 = vpack.c.b16 %v102, %v101
    %v112 = vpack.c.b16 %v104, %v103
    %v137 = vunpack.c.l.b16 %v57
    %v138 = vunpack.c.l.b16 %v58
    %v139 = vunpack.c.l.b16 %v59
    %v140 = vunpack.c.l.b16 %v60
    %v141 = vunpack.c.l.b16 %v61
    %v142 = vunpack.c.l.b16 %v62
    %v143 = vunpack.c.l.b16 %v63
    %v144 = vunpack.c.l.b16 %v64
    %v145 = vunpack.c.l.b16 %v65
    %v146 = vunpack.c.l.b16 %v66
    %v147 = vunpack.c.l.b16 %v67
    %v148 = vunpack.c.l.b16 %v68
    %v149 = vunpack.c.l.b16 %v69
    %v150 = vunpack.c.l.b16 %v70
    %v151 = vunpack.c.l.b16 %v71
    %v152 = vunpack.c.l.b16 %v72
    %v153 = vpack.c.b16 %v138, %v137
    %v154 = vpack.c.b16 %v140, %v139
    %v155 = vpack.c.b16 %v142, %v141
    %v156 = vpack.c.b16 %v144, %v143
    %v157 = vpack.c.b16 %v146, %v145
    %v158 = vpack.c.b16 %v148, %v147
    %v159 = vpack.c.b16 %v150, %v149
    %v160 = vpack.c.b16 %v152, %v151
    %169 = vmatprep.subr.bf16.mxu0 0
    %170 = vmatpush1.bf16.msra.mxu0 %v160
    %171 = vmatprep.subr.bf16.mxu0 0
    %172 = vmatpush1.bf16.msra.mxu0 %v159
    %173 = vmatprep.subr.bf16.mxu0 0
    %174 = vmatpush1.bf16.msra.mxu0 %v158
    %175 = vmatprep.subr.bf16.mxu0 0
    %176 = vmatpush1.bf16.msra.mxu0 %v157
    %177 = vmatprep.subr.bf16.mxu0 0
    %178 = vmatpush1.bf16.msra.mxu0 %v156
    %179 = vmatprep.subr.bf16.mxu0 0
    %180 = vmatpush1.bf16.msra.mxu0 %v155
    %181 = vmatprep.subr.bf16.mxu0 0
    %182 = vmatpush1.bf16.msra.mxu0 %v154
    %183 = vmatprep.subr.bf16.mxu0 0
    %184 = vmatpush1.bf16.msra.mxu0 %v153
    %185 = vmatprep.subr.bf16.mxu0 0
    %186 = vmatpush2.bf16.msra.mxu0 0
    %187 = vmatprep.subr.bf16.mxu0 0
    %188 = vmatpush2.bf16.msra.mxu0 0
    %189 = vmatprep.subr.bf16.mxu0 0
    %190 = vmatpush2.bf16.msra.mxu0 0
    %191 = vmatprep.subr.bf16.mxu0 0
    %192 = vmatpush2.bf16.msra.mxu0 0
    %193 = vmatprep.subr.bf16.mxu0 0
    %194 = vmatpush2.bf16.msra.mxu0 0
    %195 = vmatprep.subr.bf16.mxu0 0
    %196 = vmatpush2.bf16.msra.mxu0 0
    %197 = vmatprep.subr.bf16.mxu0 0
    %198 = vmatpush2.bf16.msra.mxu0 0
    %199 = vmatprep.subr.bf16.mxu0 0
    %200 = vmatpush2.bf16.msra.mxu0 0
    %201 = vmatprep.mubr.bf16.mxu0 0
    %202 = vmatmul.mubr.bf16.gmra.mxu0 %v105
    %v203 = vpop.f32.mrf.mxu0
    %v204 = vadd.f32 0.0, %v203
    %v205 = vpop.f32.mrf.mxu0
    %v206 = vpop.f32.mrf.mxu0
    %v207 = vadd.f32 0.0, %v206
    %v208 = vpop.f32.mrf.mxu0
    %209 = vmatprep.mubr.bf16.mxu0 0
    %210 = vmatmul.mubr.bf16.gmra.mxu0 %v106
    %v211 = vpop.f32.mrf.mxu0
    %v212 = vadd.f32 0.0, %v211
    %v213 = vpop.f32.mrf.mxu0
    %v214 = vpop.f32.mrf.mxu0
    %v215 = vadd.f32 0.0, %v214
    %v216 = vpop.f32.mrf.mxu0
    %217 = vmatprep.mubr.bf16.mxu0 0
    %218 = vmatmul.mubr.bf16.gmra.mxu0 %v107
    %v219 = vpop.f32.mrf.mxu0
    %v220 = vadd.f32 0.0, %v219
    %v221 = vpop.f32.mrf.mxu0
    %v222 = vpop.f32.mrf.mxu0
    %v223 = vadd.f32 0.0, %v222
    %v224 = vpop.f32.mrf.mxu0
    %225 = vmatprep.mubr.bf16.mxu0 0
    %226 = vmatmul.mubr.bf16.gmra.mxu0 %v108
    %v227 = vpop.f32.mrf.mxu0
    %v228 = vadd.f32 0.0, %v227
    %v229 = vpop.f32.mrf.mxu0
    %v230 = vpop.f32.mrf.mxu0
    %v231 = vadd.f32 0.0, %v230
    %v232 = vpop.f32.mrf.mxu0
    %233 = vmatprep.mubr.bf16.mxu0 0
    %234 = vmatmul.mubr.bf16.gmra.mxu0 %v109
    %v235 = vpop.f32.mrf.mxu0
    %v236 = vadd.f32 0.0, %v235
    %v237 = vpop.f32.mrf.mxu0
    %v238 = vpop.f32.mrf.mxu0
    %v239 = vadd.f32 0.0, %v238
    %v240 = vpop.f32.mrf.mxu0
    %241 = vmatprep.mubr.bf16.mxu0 0
    %242 = vmatmul.mubr.bf16.gmra.mxu0 %v110
    %v243 = vpop.f32.mrf.mxu0
    %v244 = vadd.f32 0.0, %v243
    %v245 = vpop.f32.mrf.mxu0
    %v246 = vpop.f32.mrf.mxu0
    %v247 = vadd.f32 0.0, %v246
    %v248 = vpop.f32.mrf.mxu0
    %249 = vmatprep.mubr.bf16.mxu0 0
    %250 = vmatmul.mubr.bf16.gmra.mxu0 %v111
    %v251 = vpop.f32.mrf.mxu0
    %v252 = vadd.f32 0.0, %v251
    %v253 = vpop.f32.mrf.mxu0
    %v254 = vpop.f32.mrf.mxu0
    %v255 = vadd.f32 0.0, %v254
    %v256 = vpop.f32.mrf.mxu0
    %257 = vmatprep.mubr.bf16.mxu0 0
    %258 = vmatmul.mubr.bf16.gmra.mxu0 %v112
    %v259 = vpop.f32.mrf.mxu0
    %v260 = vadd.f32 0.0, %v259
    %v261 = vpop.f32.mrf.mxu0
    %v262 = vpop.f32.mrf.mxu0
    %v263 = vadd.f32 0.0, %v262
    %v264 = vpop.f32.mrf.mxu0
    %265 = vdwg.mxu0
    %v266 = vpack.c.bf16 %v207, %v204
    %v267 = vpack.c.bf16 %v215, %v212
    %v268 = vpack.c.bf16 %v223, %v220
    %v269 = vpack.c.bf16 %v231, %v228
    %v270 = vpack.c.bf16 %v239, %v236
    %v271 = vpack.c.bf16 %v247, %v244
    %v272 = vpack.c.bf16 %v255, %v252
    %v273 = vpack.c.bf16 %v263, %v260
    %v282 = vunpack.c.l.b16 %v266
    %v283 = vunpack.c.h.b16 %v266
    %v284 = vunpack.c.l.b16 %v267
    %v285 = vunpack.c.h.b16 %v267
    %v286 = vunpack.c.l.b16 %v268
    %v287 = vunpack.c.h.b16 %v268
    %v288 = vunpack.c.l.b16 %v269
    %v289 = vunpack.c.h.b16 %v269
    %v290 = vunpack.c.l.b16 %v270
    %v291 = vunpack.c.h.b16 %v270
    %v292 = vunpack.c.l.b16 %v271
    %v293 = vunpack.c.h.b16 %v271
    %v294 = vunpack.c.l.b16 %v272
    %v295 = vunpack.c.h.b16 %v272
    %v296 = vunpack.c.l.b16 %v273
    %v297 = vunpack.c.h.b16 %v273
    %v298 = vpack.c.b16 %v282, %v282
    %v299 = vpack.c.b16 %v283, %v283
    %v300 = vpack.c.b16 %v284, %v284
    %v301 = vpack.c.b16 %v285, %v285
    %v302 = vpack.c.b16 %v286, %v286
    %v303 = vpack.c.b16 %v287, %v287
    %v304 = vpack.c.b16 %v288, %v288
    %v305 = vpack.c.b16 %v289, %v289
    %v306 = vpack.c.b16 %v290, %v290
    %v307 = vpack.c.b16 %v291, %v291
    %v308 = vpack.c.b16 %v292, %v292
    %v309 = vpack.c.b16 %v293, %v293
    %v310 = vpack.c.b16 %v294, %v294
    %v311 = vpack.c.b16 %v295, %v295
    %v312 = vpack.c.b16 %v296, %v296
    %v313 = vpack.c.b16 %v297, %v297
    %330 = vst [vmem:[#allocation7] sm:$0xf] %v298
    %331 = vst [vmem:[#allocation7 + $0x4] sm:$0xf] %v299
    %332 = vst [vmem:[#allocation7 + $0x8] sm:$0xf] %v300
    %333 = vst [vmem:[#allocation7 + $0xc] sm:$0xf] %v301
    %334 = vst [vmem:[#allocation7 + $0x10] sm:$0xf] %v302
    %335 = vst [vmem:[#allocation7 + $0x14] sm:$0xf] %v303
    %336 = vst [vmem:[#allocation7 + $0x18] sm:$0xf] %v304
    %337 = vst [vmem:[#allocation7 + $0x1c] sm:$0xf] %v305
    %338 = vst [vmem:[#allocation7 + $0x20] sm:$0xf] %v306
    %339 = vst [vmem:[#allocation7 + $0x24] sm:$0xf] %v307
    %340 = vst [vmem:[#allocation7 + $0x28] sm:$0xf] %v308
    %341 = vst [vmem:[#allocation7 + $0x2c] sm:$0xf] %v309
    %342 = vst [vmem:[#allocation7 + $0x30] sm:$0xf] %v310
    %343 = vst [vmem:[#allocation7 + $0x34] sm:$0xf] %v311
    %344 = vst [vmem:[#allocation7 + $0x38] sm:$0xf] %v312
    %345 = vst [vmem:[#allocation7 + $0x3c] sm:$0xf] %v313
    // Predicated region
    $region18: #{tpu_custom_call.1} parent=1 // pred_check
      _
    $region19: #{tpu_custom_call.1} parent=1 // pred_check_branch
      %347 = sbr.rel (0) target = $region21
    $region20: #{tpu_custom_call.1} parent=1 // pred_region
      %s349 = ssub.s32 1024, 1024
      %350 = vsyncadd [#allocation4], %s349
      %s351 = sshll.u32 [#allocation7], 4
      %s352 = int_to_ptr.vmem [resolvable:$true] %s351
      %357 = dma.vmem_to_hbm [thread:$0]  %s352, 1024, %s2, [#allocation4], 64, 64, 4
    $region21: #{tpu_custom_call.1} parent=1 // pred_fallthru
      _
    // Predicated region
    $region22: #{tpu_custom_call.1} parent=1 // pred_check
      _
    $region23: #{tpu_custom_call.1} parent=1 // pred_check_branch
      %359 = sbr.rel (0) target = $region25
    $region24: #{tpu_custom_call.1} parent=1 // pred_region
      %360 = dma.done [#allocation4], 1024
    $region25: #{tpu_custom_call.1} parent=1 // pred_fallthru
      _
    %361 = vsyncpa [#allocation3], 1
    %362 = vsyncpa [#allocation6], 1
    %363 = vsyncpa [#allocation4], 1

</llo_original>
